<compile_context>
chip_gen: v7x
topology: tpu7x:2x2x1
jax: 0.10.0
libtpu: 0.0.40
codegen_flags: <defaults>
</compile_context>

<pallas_src>
import jax
import jax.numpy as jnp
from jax import lax
from jax.experimental import pallas as pl
from jax.experimental.pallas import tpu as pltpu

NEG_SLOPE = 0.01          # F.leaky_relu default negative_slope
NUM_CONVS = 5
LANE = 128                # lane width for all matmul outputs / final store
HPAD = 32                 # node-feature K padding (>= max(in_feats, h_feats), mult of 16)
EPAD = 16                 # edge-feature K padding (>= 3, mult of 16)


# --------------------------------- kernel ---------------------------------

def qgnn_kernel(h0_ref, we_ref, s_ref, a_ref, invdeg_ref,
                wh_ref, w1e_ref, wk_ref, bias_ref, out_ref):
    # per-graph tensors (leading batch dim of the block is 1 -> index it away)
    we = we_ref[0]            # (E, EPAD)  bf16  padded edge features
    S = s_ref[0]              # (E, N)     bf16  0/1 src-gather one-hot
    A = a_ref[0]              # (N, E)     bf16  0/1 dst one-hot (un-normalized)
    inv_deg = invdeg_ref[0]   # (N, LANE)  f32   reciprocal in-degree, pre-broadcast

    def conv_layer(i, h):                       # h: (N, HPAD) bf16
        wh = wh_ref[i]                          # (HPAD, 2*LANE)  [W1h | W2h]
        # fused h-side projection: lanes [0:128] = h@W1h, lanes [128:256] = h@W2h
        hhw = jnp.dot(h, wh, preferred_element_type=jnp.float32)       # (N, 256)
        hw = hhw[:, :LANE].astype(jnp.bfloat16)                        # (N, 128)

        # message m_e = cat([h[src_e], w_e]) @ W1.T, reassociated as S @ (h @ W1h)
        msg = (jnp.dot(S, hw, preferred_element_type=jnp.float32)
               + jnp.dot(we, w1e_ref[i], preferred_element_type=jnp.float32))
        t = jnp.maximum(msg, NEG_SLOPE * msg)                          # leaky_relu

        # mean over in-edges: 0/1 one-hot matmul (f32 acc), f32 1/deg scale on VPU
        h_n = jnp.dot(A, t.astype(jnp.bfloat16),
                      preferred_element_type=jnp.float32) * inv_deg    # (N, 128)

        # linear2(cat([h, h_N])) + relu   (concat split into two matmuls)
        out = (hhw[:, LANE:]
               + jnp.dot(h_n.astype(jnp.bfloat16), wk_ref[i],
                         preferred_element_type=jnp.float32)
               + bias_ref[i])
        return jnp.maximum(out, 0.0)[:, :HPAD].astype(jnp.bfloat16)    # (N, HPAD)

    h = lax.fori_loop(0, NUM_CONVS, conv_layer, h0_ref[0])

    # trailing MLP head: relu(linear1(h)) -> linear2
    zz = jnp.dot(h, wh_ref[NUM_CONVS], preferred_element_type=jnp.float32)
    z = jnp.maximum(zz[:, :LANE] + bias_ref[NUM_CONVS], 0.0)
    out_ref[0] = (jnp.dot(z.astype(jnp.bfloat16), wk_ref[NUM_CONVS],
                          preferred_element_type=jnp.float32)
                  + bias_ref[NUM_CONVS + 1])


# ------------------------------ wrapper / glue ------------------------------

def prepare_inputs(h0, w_edge, S, A_onehot, inv_deg, params):
    """Pad / pack batched graph tensors and stack all weights into a few refs."""
    B, N, in_feats = h0.shape
    E = w_edge.shape[1]
    h_feats = params["l1w"].shape[0]
    inter_dim = params["convs"][0][1].shape[1]
    num_classes = params["l2w"].shape[1]

    assert len(params["convs"]) == NUM_CONVS
    assert max(in_feats, h_feats) <= HPAD and w_edge.shape[2] <= EPAD
    assert max(inter_dim, h_feats, num_classes) <= LANE
    # edge features carry raw node indices; bf16 is exact for integers <= 256
    assert N <= 256, "bf16 edge-index features only exact for N <= 256"

    # batched per-graph tensors
    h0p = jnp.pad(h0, ((0, 0), (0, 0), (0, HPAD - in_feats))).astype(jnp.bfloat16)
    wep = jnp.pad(w_edge, ((0, 0), (0, 0), (0, EPAD - w_edge.shape[2]))).astype(jnp.bfloat16)
    Sp = S.astype(jnp.bfloat16)                 # 0/1 -> exact in bf16
    Ap = A_onehot.astype(jnp.bfloat16)          # 0/1 -> exact in bf16
    invd = jnp.broadcast_to(inv_deg.astype(jnp.float32), (B, N, LANE))  # pre-broadcast

    # fused [W1h | W2h] per layer, plus head l1w in the last slot  -> (6, 32, 256)
    wh_list = []
    for (w1h, _w1e, w2h, _w2n, _b2) in params["convs"]:
        feat = w1h.shape[0]
        blk = jnp.zeros((HPAD, 2 * LANE), jnp.float32)
        blk = blk.at[:feat, :inter_dim].set(w1h)
        blk = blk.at[:feat, LANE:LANE + h_feats].set(w2h)
        wh_list.append(blk)
    wh_list.append(jnp.zeros((HPAD, 2 * LANE), jnp.float32)
                   .at[:h_feats, :h_feats].set(params["l1w"]))
    WH = jnp.stack(wh_list).astype(jnp.bfloat16)

    # edge-feature weights -> (5, 16, 128)
    W1E = jnp.stack([jnp.zeros((EPAD, LANE), jnp.float32)
                     .at[:c[1].shape[0], :inter_dim].set(c[1])
                     for c in params["convs"]]).astype(jnp.bfloat16)

    # K=128 weights: per-layer W2n, plus head l2w in the last slot -> (6, 128, 128)
    wk_list = [jnp.zeros((LANE, LANE), jnp.float32)
               .at[:inter_dim, :h_feats].set(c[3]) for c in params["convs"]]
    wk_list.append(jnp.zeros((LANE, LANE), jnp.float32)
                   .at[:h_feats, :num_classes].set(params["l2w"]))
    WK = jnp.stack(wk_list).astype(jnp.bfloat16)

    # one bias slab: rows 0..4 = conv b2, 5 = l1b, 6 = l2b  -> (7, 1, 128) f32
    bias_list = [jnp.zeros((1, LANE), jnp.float32).at[:, :h_feats].set(c[4])
                 for c in params["convs"]]
    bias_list.append(jnp.zeros((1, LANE), jnp.float32).at[:, :h_feats].set(params["l1b"]))
    bias_list.append(jnp.zeros((1, LANE), jnp.float32).at[:, :num_classes].set(params["l2b"]))
    BIAS = jnp.stack(bias_list)

    return (h0p, wep, Sp, Ap, invd, WH, W1E, WK, BIAS)


def qgnn_forward(h0, w_edge, S, A_onehot, inv_deg, params):
    args = prepare_inputs(h0, w_edge, S, A_onehot, inv_deg, params)
    (h0p, wep, Sp, Ap, invd, WH, W1E, WK, BIAS) = args
    B, N, _ = h0p.shape
    E = wep.shape[1]
    num_classes = params["l2w"].shape[1]

    mm = lambda m, k, n: 2 * m * k * n
    conv_flops = (mm(N, HPAD, 2 * LANE) + mm(E, N, LANE) + mm(E, EPAD, LANE)
                  + mm(N, E, LANE) + mm(N, LANE, LANE))
    flops = B * (NUM_CONVS * conv_flops + mm(N, HPAD, 2 * LANE) + mm(N, LANE, LANE))
    bytes_accessed = (sum(int(a.size) * a.dtype.itemsize for a in args)
                      + B * N * LANE * 4)

    def graph_spec(shape):           # per-graph block, indexed by the batch grid axis
        return pl.BlockSpec((1,) + tuple(shape), lambda b: (b, 0, 0))

    def const_spec(arr):             # whole array, constant index -> fetched once
        return pl.BlockSpec(arr.shape, lambda b: (0,) * arr.ndim)

    out_padded = pl.pallas_call(
        qgnn_kernel,
        out_shape=jax.ShapeDtypeStruct((B, N, LANE), jnp.float32),
        grid=(B,),
        in_specs=[
            graph_spec((N, HPAD)),    # h0
            graph_spec((E, EPAD)),    # edge features
            graph_spec((E, N)),       # S (src one-hot)
            graph_spec((N, E)),       # A (dst one-hot)
            graph_spec((N, LANE)),    # 1/in-degree, pre-broadcast
            const_spec(WH),           # (6, 32, 256)  [W1h|W2h] + head l1w
            const_spec(W1E),          # (5, 16, 128)
            const_spec(WK),           # (6, 128, 128) W2n + head l2w
            const_spec(BIAS),         # (7, 1, 128)
        ],
        out_specs=pl.BlockSpec((1, N, LANE), lambda b: (b, 0, 0)),
        compiler_params=pltpu.CompilerParams(
            dimension_semantics=("parallel",),          # batch axis -> 2 TCs on v7x
            vmem_limit_bytes=32 * 1024 * 1024),         # well under v7x's 64 MiB
        cost_estimate=pl.CostEstimate(flops=int(flops), transcendentals=0,
                                      bytes_accessed=int(bytes_accessed)),
    )(*args)
    return out_padded[:, :, :num_classes]


# ------------------- parameter construction (deterministic) -------------------

def _xavier_normal(key, out_dim, in_dim, gain):
    std = gain * (2.0 / (in_dim + out_dim)) ** 0.5
    return std * jax.random.normal(key, (out_dim, in_dim), dtype=jnp.float32)


def make_params(key, in_feats, h_feats, num_classes, inter_dim):
    gain = 2.0 ** 0.5  # calculate_gain('relu')
    keys = iter(jax.random.split(key, 64))
    convs = []
    feat = in_feats
    for _ in range(NUM_CONVS):
        w1 = _xavier_normal(next(keys), inter_dim, feat + 3, gain)        # linear1 (no bias)
        w2 = _xavier_normal(next(keys), h_feats, feat + inter_dim, gain)  # linear2
        bound2 = 1.0 / (feat + inter_dim) ** 0.5
        b2 = jax.random.uniform(next(keys), (1, h_feats), jnp.float32, -bound2, bound2)
        w1t = w1.T                      # (feat+3, inter)
        w2t = w2.T                      # (feat+inter, h_feats)
        convs.append((w1t[:feat], w1t[feat:], w2t[:feat], w2t[feat:], b2))
        feat = h_feats

    l1w = _xavier_normal(next(keys), h_feats, h_feats, gain).T
    l1b = jax.random.uniform(next(keys), (1, h_feats), jnp.float32,
                             -1.0 / h_feats ** 0.5, 1.0 / h_feats ** 0.5)
    l2w = _xavier_normal(next(keys), num_classes, h_feats, gain).T
    l2b = jax.random.uniform(next(keys), (1, num_classes), jnp.float32,
                             -1.0 / h_feats ** 0.5, 1.0 / h_feats ** 0.5)
    emb = jax.random.normal(next(keys), (in_feats, in_feats), dtype=jnp.float32)
    return {"convs": convs, "l1w": l1w, "l1b": l1b, "l2w": l2w, "l2b": l2b,
            "embedding": emb}


# ------------------------------- references -------------------------------

def ref_forward_matched(h0, w_edge, S, A_onehot, inv_deg, params):
    """Pure-JAX mirror of the kernel math (same padding, bf16 casts, reassociation)."""
    (h0p, wep, Sp, Ap, invd, WH, W1E, WK, BIAS) = prepare_inputs(
        h0, w_edge, S, A_onehot, inv_deg, params)
    num_classes = params["l2w"].shape[1]
    outs = []
    for b in range(h0p.shape[0]):
        h, we, S_, A_, iv = h0p[b], wep[b], Sp[b], Ap[b], invd[b]
        for i in range(NUM_CONVS):
            hhw = jnp.dot(h, WH[i], preferred_element_type=jnp.float32)
            hw = hhw[:, :LANE].astype(jnp.bfloat16)
            msg = (jnp.dot(S_, hw, preferred_element_type=jnp.float32)
                   + jnp.dot(we, W1E[i], preferred_element_type=jnp.float32))
            t = jnp.maximum(msg, NEG_SLOPE * msg)
            h_n = jnp.dot(A_, t.astype(jnp.bfloat16),
                          preferred_element_type=jnp.float32) * iv
            out = (hhw[:, LANE:]
                   + jnp.dot(h_n.astype(jnp.bfloat16), WK[i],
                             preferred_element_type=jnp.float32)
                   + BIAS[i])
            h = jnp.maximum(out, 0.0)[:, :HPAD].astype(jnp.bfloat16)
        zz = jnp.dot(h, WH[NUM_CONVS], preferred_element_type=jnp.float32)
        z = jnp.maximum(zz[:, :LANE] + BIAS[NUM_CONVS], 0.0)
        o = (jnp.dot(z.astype(jnp.bfloat16), WK[NUM_CONVS],
                     preferred_element_type=jnp.float32)
             + BIAS[NUM_CONVS + 1])
        outs.append(o)
    return jnp.stack(outs)[:, :, :num_classes]


def ref_forward_f32(h0, w_edge, S, A_mean, params):
    """Independent single-graph f32 reference in the original formulation."""
    h = h0
    for (w1h, w1e, w2h, w2n, b2) in params["convs"]:
        t = (S @ h) @ w1h + w_edge @ w1e
        t = jnp.where(t > 0, t, NEG_SLOPE * t)
        h_n = A_mean @ t
        h = jnp.maximum(h @ w2h + h_n @ w2n + b2, 0.0)
    h = jnp.maximum(h @ params["l1w"] + params["l1b"], 0.0)
    return h @ params["l2w"] + params["l2b"]


# ---------------------------------- main ----------------------------------

if __name__ == "__main__":
    in_feats, h_feats, num_classes, inter_dim = 8, 32, 6, 16
    B, N, E = 4, 16, 32   # batch of small synthetic graphs

    key = jax.random.PRNGKey(0)
    params = make_params(key, in_feats, h_feats, num_classes, inter_dim)

    # deterministic synthetic batched graph data
    b_idx = jnp.arange(B, dtype=jnp.int32)[:, None]
    gate_type = (jnp.arange(N, dtype=jnp.int32)[None, :] + b_idx) % in_feats   # (B, N)
    src = (jnp.arange(E, dtype=jnp.int32)[None, :] * 5 + 3 + b_idx) % N        # (B, E)
    dst = (jnp.arange(E, dtype=jnp.int32)[None, :] + 2 * b_idx) % N            # (B, E)
    rev = jnp.broadcast_to((jnp.arange(E) % 2).astype(jnp.float32), (B, E))

    # g.edata['w'] = cat([src_idx, dst_idx, reversed], dim=1)  -> (B, E, 3)
    w_edge = jnp.stack([src.astype(jnp.float32), dst.astype(jnp.float32), rev], axis=2)

    # embedding lookup (host-side glue, tiny gather)
    h0 = params["embedding"][gate_type]                                         # (B, N, in_feats)

    # one-hot gather / dst matrices + reciprocal in-degree (host-side glue)
    S = (src[:, :, None] == jnp.arange(N)[None, None, :]).astype(jnp.float32)   # (B, E, N)
    A = (jnp.arange(N)[None, :, None] == dst[:, None, :]).astype(jnp.float32)   # (B, N, E)
    deg = A.sum(axis=2, keepdims=True)
    inv_deg = 1.0 / jnp.maximum(deg, 1.0)       # mean-of-empty = 0 (DGL convention)

    out = qgnn_forward(h0, w_edge, S, A, inv_deg, params)
    out = jax.block_until_ready(out)
    assert out.shape == (B, N, num_classes)

    # tight check against a reference that mirrors the kernel's bf16/f32 math
    ref_m = ref_forward_matched(h0, w_edge, S, A, inv_deg, params)
    assert jnp.allclose(out, ref_m, atol=1e-2, rtol=1e-2), \
        "kernel mismatch vs bf16-matched reference"

    # loose sanity check against the independent full-f32 formulation
    ref32 = jnp.stack([ref_forward_f32(h0[b], w_edge[b], S[b],
                                       A[b] * inv_deg[b], params)
                       for b in range(B)])
    assert jnp.allclose(out, ref32, atol=5e-1, rtol=2e-1), \
        "kernel drifted too far from f32 reference"

    print("KERNEL_OK")
</pallas_src>

<mosaic_0001>
module attributes {stable_mosaic.version = 11 : i64} {
  func.func @qgnn_kernel(%arg0: i32, %arg1: memref<1x16x32xbf16, #tpu.memory_space<vmem>>, %arg2: memref<1x32x16xbf16, #tpu.memory_space<vmem>>, %arg3: memref<1x32x16xbf16, #tpu.memory_space<vmem>>, %arg4: memref<1x16x32xbf16, #tpu.memory_space<vmem>>, %arg5: memref<1x16x128xf32, #tpu.memory_space<vmem>>, %arg6: memref<6x32x256xbf16, #tpu.memory_space<vmem>>, %arg7: memref<5x16x128xbf16, #tpu.memory_space<vmem>>, %arg8: memref<6x128x128xbf16, #tpu.memory_space<vmem>>, %arg9: memref<7x1x128xf32, #tpu.memory_space<vmem>>, %arg10: memref<1x16x128xf32, #tpu.memory_space<vmem>>) attributes {dimension_semantics = [#tpu.dimension_semantics<parallel>], iteration_bounds = array<i64: 4>, scalar_prefetch = 0 : i64, scratch_operands = 0 : i64, tpu.core_type = #tpu.core_type<tc>, window_params = [{transform_indices = @transform_0, window_bounds = array<i64: 1, 16, 32>}, {transform_indices = @transform_1, window_bounds = array<i64: 1, 32, 16>}, {transform_indices = @transform_2, window_bounds = array<i64: 1, 32, 16>}, {transform_indices = @transform_3, window_bounds = array<i64: 1, 16, 32>}, {transform_indices = @transform_4, window_bounds = array<i64: 1, 16, 128>}, {pipeline_mode = #tpu.pipeline_mode<synchronous>, transform_indices = @transform_5, window_bounds = array<i64: 6, 32, 256>}, {pipeline_mode = #tpu.pipeline_mode<synchronous>, transform_indices = @transform_6, window_bounds = array<i64: 5, 16, 128>}, {pipeline_mode = #tpu.pipeline_mode<synchronous>, transform_indices = @transform_7, window_bounds = array<i64: 6, 128, 128>}, {pipeline_mode = #tpu.pipeline_mode<synchronous>, transform_indices = @transform_8, window_bounds = array<i64: 7, 1, 128>}, {transform_indices = @transform_9, window_bounds = array<i64: 1, 16, 128>}]} {
    %c0 = arith.constant 0 : index
    %c0_0 = arith.constant 0 : index
    %c0_1 = arith.constant 0 : index
    %0 = vector.load %arg2[%c0, %c0_0, %c0_1] : memref<1x32x16xbf16, #tpu.memory_space<vmem>>, vector<1x32x16xbf16>
    %1 = vector.shape_cast %0 : vector<1x32x16xbf16> to vector<32x16xbf16>
    %c0_2 = arith.constant 0 : index
    %c0_3 = arith.constant 0 : index
    %c0_4 = arith.constant 0 : index
    %2 = vector.load %arg3[%c0_2, %c0_3, %c0_4] : memref<1x32x16xbf16, #tpu.memory_space<vmem>>, vector<1x32x16xbf16>
    %3 = vector.shape_cast %2 : vector<1x32x16xbf16> to vector<32x16xbf16>
    %c0_5 = arith.constant 0 : index
    %c0_6 = arith.constant 0 : index
    %c0_7 = arith.constant 0 : index
    %4 = vector.load %arg4[%c0_5, %c0_6, %c0_7] : memref<1x16x32xbf16, #tpu.memory_space<vmem>>, vector<1x16x32xbf16>
    %5 = vector.shape_cast %4 : vector<1x16x32xbf16> to vector<16x32xbf16>
    %c0_8 = arith.constant 0 : index
    %c0_9 = arith.constant 0 : index
    %c0_10 = arith.constant 0 : index
    %6 = vector.load %arg5[%c0_8, %c0_9, %c0_10] : memref<1x16x128xf32, #tpu.memory_space<vmem>>, vector<1x16x128xf32>
    %7 = vector.shape_cast %6 : vector<1x16x128xf32> to vector<16x128xf32>
    %c0_11 = arith.constant 0 : index
    %c0_12 = arith.constant 0 : index
    %c0_13 = arith.constant 0 : index
    %8 = vector.load %arg1[%c0_11, %c0_12, %c0_13] : memref<1x16x32xbf16, #tpu.memory_space<vmem>>, vector<1x16x32xbf16>
    %9 = vector.shape_cast %8 : vector<1x16x32xbf16> to vector<16x32xbf16>
    %c0_i32 = arith.constant 0 : i32
    %c5_i32 = arith.constant 5 : i32
    %10 = arith.addi %c0_i32, %c5_i32 : i32
    %c1_i32 = arith.constant 1 : i32
    %11 = scf.for %arg11 = %c0_i32 to %10 step %c1_i32 iter_args(%arg12 = %9) -> (vector<16x32xbf16>)  : i32 {
      %33 = arith.index_cast %arg11 : i32 to index
      %c0_30 = arith.constant 0 : index
      %c0_31 = arith.constant 0 : index
      %34 = vector.load %arg6[%33, %c0_30, %c0_31] : memref<6x32x256xbf16, #tpu.memory_space<vmem>>, vector<1x32x256xbf16>
      %35 = vector.shape_cast %34 : vector<1x32x256xbf16> to vector<32x256xbf16>
      %cst_32 = arith.constant dense<0.000000e+00> : vector<16x256xf32>
      %36 = tpu.matmul %arg12, %35, %cst_32 {dimension_numbers = #tpu.dot_dimension_numbers<[1], [0], [0], [1], [0, 0, 1, 1], [], []>} : vector<16x32xbf16>, vector<32x256xbf16>, vector<16x256xf32> -> vector<16x256xf32>
      %37 = vector.extract_strided_slice %36 {offsets = [0, 0], sizes = [16, 128], strides = [1, 1]} : vector<16x256xf32> to vector<16x128xf32>
      %38 = arith.truncf %37 : vector<16x128xf32> to vector<16x128xbf16>
      %cst_33 = arith.constant dense<0.000000e+00> : vector<32x128xf32>
      %39 = tpu.matmul %3, %38, %cst_33 {dimension_numbers = #tpu.dot_dimension_numbers<[1], [0], [0], [1], [0, 0, 1, 1], [], []>} : vector<32x16xbf16>, vector<16x128xbf16>, vector<32x128xf32> -> vector<32x128xf32>
      %40 = arith.index_cast %arg11 : i32 to index
      %c0_34 = arith.constant 0 : index
      %c0_35 = arith.constant 0 : index
      %41 = vector.load %arg7[%40, %c0_34, %c0_35] : memref<5x16x128xbf16, #tpu.memory_space<vmem>>, vector<1x16x128xbf16>
      %42 = vector.shape_cast %41 : vector<1x16x128xbf16> to vector<16x128xbf16>
      %cst_36 = arith.constant dense<0.000000e+00> : vector<32x128xf32>
      %43 = tpu.matmul %1, %42, %cst_36 {dimension_numbers = #tpu.dot_dimension_numbers<[1], [0], [0], [1], [0, 0, 1, 1], [], []>} : vector<32x16xbf16>, vector<16x128xbf16>, vector<32x128xf32> -> vector<32x128xf32>
      %44 = arith.addf %39, %43 : vector<32x128xf32>
      %cst_37 = arith.constant 0.00999999977 : f32
      %45 = vector.broadcast %cst_37 : f32 to vector<32x128xf32>
      %46 = arith.mulf %45, %44 : vector<32x128xf32>
      %47 = arith.maximumf %44, %46 : vector<32x128xf32>
      %48 = arith.truncf %47 : vector<32x128xf32> to vector<32x128xbf16>
      %cst_38 = arith.constant dense<0.000000e+00> : vector<16x128xf32>
      %49 = tpu.matmul %5, %48, %cst_38 {dimension_numbers = #tpu.dot_dimension_numbers<[1], [0], [0], [1], [0, 0, 1, 1], [], []>} : vector<16x32xbf16>, vector<32x128xbf16>, vector<16x128xf32> -> vector<16x128xf32>
      %50 = arith.mulf %49, %7 : vector<16x128xf32>
      %51 = vector.extract_strided_slice %36 {offsets = [0, 128], sizes = [16, 128], strides = [1, 1]} : vector<16x256xf32> to vector<16x128xf32>
      %52 = arith.truncf %50 : vector<16x128xf32> to vector<16x128xbf16>
      %53 = arith.index_cast %arg11 : i32 to index
      %c0_39 = arith.constant 0 : index
      %c0_40 = arith.constant 0 : index
      %54 = vector.load %arg8[%53, %c0_39, %c0_40] : memref<6x128x128xbf16, #tpu.memory_space<vmem>>, vector<1x128x128xbf16>
      %55 = vector.shape_cast %54 : vector<1x128x128xbf16> to vector<128x128xbf16>
      %cst_41 = arith.constant dense<0.000000e+00> : vector<16x128xf32>
      %56 = tpu.matmul %52, %55, %cst_41 {dimension_numbers = #tpu.dot_dimension_numbers<[1], [0], [0], [1], [0, 0, 1, 1], [], []>} : vector<16x128xbf16>, vector<128x128xbf16>, vector<16x128xf32> -> vector<16x128xf32>
      %57 = arith.addf %51, %56 : vector<16x128xf32>
      %58 = arith.index_cast %arg11 : i32 to index
      %c0_42 = arith.constant 0 : index
      %c0_43 = arith.constant 0 : index
      %59 = vector.load %arg9[%58, %c0_42, %c0_43] : memref<7x1x128xf32, #tpu.memory_space<vmem>>, vector<1x1x128xf32>
      %60 = vector.shape_cast %59 : vector<1x1x128xf32> to vector<1x128xf32>
      %61 = vector.broadcast %60 : vector<1x128xf32> to vector<16x128xf32>
      %62 = arith.addf %57, %61 : vector<16x128xf32>
      %cst_44 = arith.constant 0.000000e+00 : f32
      %63 = vector.broadcast %cst_44 : f32 to vector<16x128xf32>
      %64 = arith.maximumf %62, %63 : vector<16x128xf32>
      %65 = vector.extract_strided_slice %64 {offsets = [0, 0], sizes = [16, 32], strides = [1, 1]} : vector<16x128xf32> to vector<16x32xf32>
      %66 = arith.truncf %65 : vector<16x32xf32> to vector<16x32xbf16>
      scf.yield %66 : vector<16x32xbf16>
    }
    %c5_i32_14 = arith.constant 5 : i32
    %c5 = arith.constant 5 : index
    %c0_15 = arith.constant 0 : index
    %c0_16 = arith.constant 0 : index
    %12 = vector.load %arg6[%c5, %c0_15, %c0_16] : memref<6x32x256xbf16, #tpu.memory_space<vmem>>, vector<1x32x256xbf16>
    %13 = vector.shape_cast %12 : vector<1x32x256xbf16> to vector<32x256xbf16>
    %cst = arith.constant dense<0.000000e+00> : vector<16x256xf32>
    %14 = tpu.matmul %11, %13, %cst {dimension_numbers = #tpu.dot_dimension_numbers<[1], [0], [0], [1], [0, 0, 1, 1], [], []>} : vector<16x32xbf16>, vector<32x256xbf16>, vector<16x256xf32> -> vector<16x256xf32>
    %15 = vector.extract_strided_slice %14 {offsets = [0, 0], sizes = [16, 128], strides = [1, 1]} : vector<16x256xf32> to vector<16x128xf32>
    %c5_17 = arith.constant 5 : index
    %c0_18 = arith.constant 0 : index
    %c0_19 = arith.constant 0 : index
    %16 = vector.load %arg9[%c5_17, %c0_18, %c0_19] : memref<7x1x128xf32, #tpu.memory_space<vmem>>, vector<1x1x128xf32>
    %17 = vector.shape_cast %16 : vector<1x1x128xf32> to vector<1x128xf32>
    %18 = vector.broadcast %17 : vector<1x128xf32> to vector<16x128xf32>
    %19 = arith.addf %15, %18 : vector<16x128xf32>
    %cst_20 = arith.constant 0.000000e+00 : f32
    %20 = vector.broadcast %cst_20 : f32 to vector<16x128xf32>
    %21 = arith.maximumf %19, %20 : vector<16x128xf32>
    %22 = arith.truncf %21 : vector<16x128xf32> to vector<16x128xbf16>
    %c5_21 = arith.constant 5 : index
    %c0_22 = arith.constant 0 : index
    %c0_23 = arith.constant 0 : index
    %23 = vector.load %arg8[%c5_21, %c0_22, %c0_23] : memref<6x128x128xbf16, #tpu.memory_space<vmem>>, vector<1x128x128xbf16>
    %24 = vector.shape_cast %23 : vector<1x128x128xbf16> to vector<128x128xbf16>
    %cst_24 = arith.constant dense<0.000000e+00> : vector<16x128xf32>
    %25 = tpu.matmul %22, %24, %cst_24 {dimension_numbers = #tpu.dot_dimension_numbers<[1], [0], [0], [1], [0, 0, 1, 1], [], []>} : vector<16x128xbf16>, vector<128x128xbf16>, vector<16x128xf32> -> vector<16x128xf32>
    %c6 = arith.constant 6 : index
    %c0_25 = arith.constant 0 : index
    %c0_26 = arith.constant 0 : index
    %26 = vector.load %arg9[%c6, %c0_25, %c0_26] : memref<7x1x128xf32, #tpu.memory_space<vmem>>, vector<1x1x128xf32>
    %27 = vector.shape_cast %26 : vector<1x1x128xf32> to vector<1x128xf32>
    %28 = vector.broadcast %27 : vector<1x128xf32> to vector<16x128xf32>
    %29 = arith.addf %25, %28 : vector<16x128xf32>
    %c0_27 = arith.constant 0 : index
    %c0_28 = arith.constant 0 : index
    %c0_29 = arith.constant 0 : index
    %30 = vector.load %arg10[%c0_27, %c0_28, %c0_29] : memref<1x16x128xf32, #tpu.memory_space<vmem>>, vector<1x16x128xf32>
    %31 = vector.shape_cast %30 : vector<1x16x128xf32> to vector<16x128xf32>
    %32 = vector.shape_cast %29 : vector<16x128xf32> to vector<1x16x128xf32>
    tpu.vector_store %arg10[%c0_27, %c0_28, %c0_29], %32 {strides = array<i32>} : memref<1x16x128xf32, #tpu.memory_space<vmem>>, vector<1x16x128xf32>,
    return
  }
  func.func @transform_0(%arg0: i32) -> (i32, i32, i32) {
    %c0_i32 = arith.constant 0 : i32
    %c0_i32_0 = arith.constant 0 : i32
    %c0_i32_1 = arith.constant 0 : i32
    return %arg0, %c0_i32, %c0_i32_0 : i32, i32, i32
  }
  func.func @transform_1(%arg0: i32) -> (i32, i32, i32) {
    %c0_i32 = arith.constant 0 : i32
    %c0_i32_0 = arith.constant 0 : i32
    %c0_i32_1 = arith.constant 0 : i32
    return %arg0, %c0_i32, %c0_i32_0 : i32, i32, i32
  }
  func.func @transform_2(%arg0: i32) -> (i32, i32, i32) {
    %c0_i32 = arith.constant 0 : i32
    %c0_i32_0 = arith.constant 0 : i32
    %c0_i32_1 = arith.constant 0 : i32
    return %arg0, %c0_i32, %c0_i32_0 : i32, i32, i32
  }
  func.func @transform_3(%arg0: i32) -> (i32, i32, i32) {
    %c0_i32 = arith.constant 0 : i32
    %c0_i32_0 = arith.constant 0 : i32
    %c0_i32_1 = arith.constant 0 : i32
    return %arg0, %c0_i32, %c0_i32_0 : i32, i32, i32
  }
  func.func @transform_4(%arg0: i32) -> (i32, i32, i32) {
    %c0_i32 = arith.constant 0 : i32
    %c0_i32_0 = arith.constant 0 : i32
    %c0_i32_1 = arith.constant 0 : i32
    return %arg0, %c0_i32, %c0_i32_0 : i32, i32, i32
  }
  func.func @transform_5(%arg0: i32) -> (i32, i32, i32) {
    %c0_i32 = arith.constant 0 : i32
    %c0_i32_0 = arith.constant 0 : i32
    %c0_i32_1 = arith.constant 0 : i32
    %c0_i32_2 = arith.constant 0 : i32
    return %c0_i32, %c0_i32_0, %c0_i32_1 : i32, i32, i32
  }
  func.func @transform_6(%arg0: i32) -> (i32, i32, i32) {
    %c0_i32 = arith.constant 0 : i32
    %c0_i32_0 = arith.constant 0 : i32
    %c0_i32_1 = arith.constant 0 : i32
    %c0_i32_2 = arith.constant 0 : i32
    return %c0_i32, %c0_i32_0, %c0_i32_1 : i32, i32, i32
  }
  func.func @transform_7(%arg0: i32) -> (i32, i32, i32) {
    %c0_i32 = arith.constant 0 : i32
    %c0_i32_0 = arith.constant 0 : i32
    %c0_i32_1 = arith.constant 0 : i32
    %c0_i32_2 = arith.constant 0 : i32
    return %c0_i32, %c0_i32_0, %c0_i32_1 : i32, i32, i32
  }
  func.func @transform_8(%arg0: i32) -> (i32, i32, i32) {
    %c0_i32 = arith.constant 0 : i32
    %c0_i32_0 = arith.constant 0 : i32
    %c0_i32_1 = arith.constant 0 : i32
    %c0_i32_2 = arith.constant 0 : i32
    return %c0_i32, %c0_i32_0, %c0_i32_1 : i32, i32, i32
  }
  func.func @transform_9(%arg0: i32) -> (i32, i32, i32) {
    %c0_i32 = arith.constant 0 : i32
    %c0_i32_0 = arith.constant 0 : i32
    %c0_i32_1 = arith.constant 0 : i32
    return %arg0, %c0_i32, %c0_i32_0 : i32, i32, i32
  }
}

</mosaic_0001>

<llo_original>
// kernel: tpu_custom_call.1
$region0: #{tpu_custom_call.1}
  #allocation0 [shape = 'u32[]', space=smem, size = 0x4, offset = 0x4, fixed_abs, tag = 'smem constant byte address 0x4 - core index']
  #allocation1 [shape = 'u32[144,128]{1,0:T(1,128)}', space=vmem, size = 0x12000, scoped, tag = 'internal scratch']
  %s0 = inlined_call_operand.hbm [shape: bf16[4,16,32], index: 0, kind: input, shape index: {}]
  %s1 = inlined_call_operand.vmem [shape: bf16[4,32,16], index: 1, kind: input, shape index: {}]
  %s2 = inlined_call_operand.vmem [shape: bf16[4,32,16], index: 2, kind: input, shape index: {}]
  %s3 = inlined_call_operand.hbm [shape: bf16[4,16,32], index: 3, kind: input, shape index: {}]
  %s4 = inlined_call_operand.hbm [shape: f32[4,16,128], index: 4, kind: input, shape index: {}]
  %s5 = inlined_call_operand.vmem [shape: bf16[6,32,256], index: 5, kind: input, shape index: {}]
  %s6 = inlined_call_operand.hbm [shape: bf16[5,16,128], index: 6, kind: input, shape index: {}]
  %s7 = inlined_call_operand.hbm [shape: bf16[6,128,128], index: 7, kind: input, shape index: {}]
  %s8 = inlined_call_operand.vmem [shape: f32[7,1,128], index: 8, kind: input, shape index: {}]
  %s9 = inlined_call_operand.hbm [shape: f32[4,16,128], index: 9, kind: output, shape index: {}]
  %s10 = sld [smem:[#allocation0]]
  $region96: #{tpu_custom_call.1} parent=0
    _
  %s12 = ssub.s32 1, %s10
  %s13 = scalar_select 0, %s12, %s10
  $region1: #{tpu_custom_call.1} parent=0
    #allocation2 [shape = 'u8[8192]{0}', space=vmem, size = 0x2000, scoped, tag = 'input window, operand 0']
    #allocation3 [shape = 's32[2]{0}', space=sflag, size = 0x8, scoped, tag = 'scoped memory for tpu_custom_call.1']
    #allocation4 [shape = 's32[2]{0}', space=sflag, size = 0x8, scoped, tag = 'scoped memory for tpu_custom_call.1']
    #allocation5 [shape = 'u8[8192]{0}', space=vmem, size = 0x2000, scoped, tag = 'input window, operand 3']
    #allocation6 [shape = 's32[2]{0}', space=sflag, size = 0x8, scoped, tag = 'scoped memory for tpu_custom_call.1']
    #allocation7 [shape = 'u8[16384]{0}', space=vmem, size = 0x4000, scoped, tag = 'input window, operand 4']
    #allocation8 [shape = 'u8[20480]{0}', space=vmem, size = 0x5000, scoped, tag = 'input window, operand 6, single buffered']
    #allocation9 [shape = 's32[1]{0}', space=sflag, size = 0x4, scoped, tag = 'scoped memory for tpu_custom_call.1']
    #allocation10 [shape = 'u8[196608]{0}', space=vmem, size = 0x30000, scoped, tag = 'input window, operand 7, single buffered']
    #allocation11 [shape = 'u8[16384]{0}', space=vmem, size = 0x4000, scoped, tag = 'output window, operand 0']
    %14 = vsyncpa [#allocation3], 0
    %s15 = scalar_lea.sflag [#allocation3], 1
    %16 = vsyncpa %s15, 0
    %17 = vsyncpa [#allocation6], 0
    %s18 = scalar_lea.sflag [#allocation6], 1
    %19 = vsyncpa %s18, 0
    %20 = vsyncpa [#allocation9], 0
    %21 = vsyncpa [#allocation4], 0
    %s22 = scalar_lea.sflag [#allocation4], 1
    %23 = vsyncpa %s22, 0
    loop: start=0, step=1, limit=6
    $region2: #{tpu_custom_call.1} parent=1 // loop_pre_header
      _
    $region3: #{tpu_custom_call.1} parent=1 // loop_header
      %s25 = sphi 0, %s29
      %p26 = scmp.ge.s32.totalorder %s25, 6
      %s35 = sphi 0, %s37
      %s38 = sphi 0, %s35
      %s39 = sphi 0, %s38
      %s55 = sphi 0, %s39
      %s61 = sphi 0, %s63
      %s64 = sphi 0, %s61
      %s65 = sphi 0, %s64
      %s81 = sphi 0, %s65
      %s87 = sphi 0, %s89
      %s90 = sphi 0, %s87
      %s91 = sphi 0, %s90
      %s107 = sphi 0, %s91
      %s113 = sphi 0, %s115
      %s116 = sphi 0, %s113
      %s117 = sphi 0, %s116
      %s133 = sphi 0, %s117
      %s139 = sphi 0, %s141
      %s142 = sphi 0, %s139
      %s143 = sphi 0, %s142
      %s159 = sphi 0, %s143
      %s163 = sphi 0, %s163
      %s165 = sphi 0, %s163
      %s166 = sphi 0, %s165
      %s180 = sphi 0, %s166
      %s184 = sphi 0, %s184
      %s186 = sphi 0, %s184
      %s187 = sphi 0, %s186
      %s201 = sphi 0, %s187
      %s205 = sphi 0, %s205
      %s207 = sphi 0, %s205
      %s208 = sphi 0, %s207
      %s222 = sphi 0, %s208
      %s226 = sphi 0, %s226
      %s228 = sphi 0, %s226
      %s229 = sphi 0, %s228
      %s243 = sphi 0, %s229
      %s249 = sphi 0, %s251
      %s252 = sphi 0, %s249
      %s253 = sphi 0, %s252
      %s269 = sphi 0, %s253
    $region4: #{tpu_custom_call.1} parent=1 // loop_header_branch
      %28 = sbr.rel (%p26) target = $region8
    $region5: #{tpu_custom_call.1} parent=1 // loop_body
      %s30 = ssub.s32 %s25, 1
      %s31 = ssub.s32 %s25, 2
      %s32 = sadd.s32 %s25, 1
      %s33 = ssub.s32 %s25, %s32
      %p34 = scmp.eq.s32.totalorder %s33, 0
      %s36 = sadd.s32 %s35, 1
      %s37 = scalar_select %p34, %s35, %s36
      %p40 = pneg %p34
      %p41 = scmp.eq.s32.totalorder %s25, 3
      %p42 = por %p40, %p41
      %p43 = scmp.ne.s32.totalorder %s35, %s38
      %p44 = scmp.eq.s32.totalorder %s25, 0
      %p45 = por %p43, %p44
      %p46 = scmp.ne.s32.totalorder %s35, %s38
      %p47 = scmp.eq.s32.totalorder %s30, 3
      %p48 = por %p46, %p47
      %p49 = scmp.ne.s32.totalorder %s38, %s39
      %p50 = scmp.eq.s32.totalorder %s30, 0
      %p51 = por %p49, %p50
      %p52 = scmp.ne.s32.totalorder %s38, %s39
      %p53 = scmp.eq.s32.totalorder %s31, 3
      %p54 = por %p52, %p53
      %p56 = scmp.ne.s32.totalorder %s39, %s55
      %p57 = scmp.eq.s32.totalorder %s31, 0
      %p58 = por %p56, %p57
      %s59 = ssub.s32 %s25, %s32
      %p60 = scmp.eq.s32.totalorder %s59, 0
      %s62 = sadd.s32 %s61, 1
      %s63 = scalar_select %p60, %s61, %s62
      %p66 = pneg %p60
      %p67 = scmp.eq.s32.totalorder %s25, 3
      %p68 = por %p66, %p67
      %p69 = scmp.ne.s32.totalorder %s61, %s64
      %p70 = scmp.eq.s32.totalorder %s25, 0
      %p71 = por %p69, %p70
      %p72 = scmp.ne.s32.totalorder %s61, %s64
      %p73 = scmp.eq.s32.totalorder %s30, 3
      %p74 = por %p72, %p73
      %p75 = scmp.ne.s32.totalorder %s64, %s65
      %p76 = scmp.eq.s32.totalorder %s30, 0
      %p77 = por %p75, %p76
      %p78 = scmp.ne.s32.totalorder %s64, %s65
      %p79 = scmp.eq.s32.totalorder %s31, 3
      %p80 = por %p78, %p79
      %p82 = scmp.ne.s32.totalorder %s65, %s81
      %p83 = scmp.eq.s32.totalorder %s31, 0
      %p84 = por %p82, %p83
      %s85 = ssub.s32 %s25, %s32
      %p86 = scmp.eq.s32.totalorder %s85, 0
      %s88 = sadd.s32 %s87, 1
      %s89 = scalar_select %p86, %s87, %s88
      %p92 = pneg %p86
      %p93 = scmp.eq.s32.totalorder %s25, 3
      %p94 = por %p92, %p93
      %p95 = scmp.ne.s32.totalorder %s87, %s90
      %p96 = scmp.eq.s32.totalorder %s25, 0
      %p97 = por %p95, %p96
      %p98 = scmp.ne.s32.totalorder %s87, %s90
      %p99 = scmp.eq.s32.totalorder %s30, 3
      %p100 = por %p98, %p99
      %p101 = scmp.ne.s32.totalorder %s90, %s91
      %p102 = scmp.eq.s32.totalorder %s30, 0
      %p103 = por %p101, %p102
      %p104 = scmp.ne.s32.totalorder %s90, %s91
      %p105 = scmp.eq.s32.totalorder %s31, 3
      %p106 = por %p104, %p105
      %p108 = scmp.ne.s32.totalorder %s91, %s107
      %p109 = scmp.eq.s32.totalorder %s31, 0
      %p110 = por %p108, %p109
      %s111 = ssub.s32 %s25, %s32
      %p112 = scmp.eq.s32.totalorder %s111, 0
      %s114 = sadd.s32 %s113, 1
      %s115 = scalar_select %p112, %s113, %s114
      %p118 = pneg %p112
      %p119 = scmp.eq.s32.totalorder %s25, 3
      %p120 = por %p118, %p119
      %p121 = scmp.ne.s32.totalorder %s113, %s116
      %p122 = scmp.eq.s32.totalorder %s25, 0
      %p123 = por %p121, %p122
      %p124 = scmp.ne.s32.totalorder %s113, %s116
      %p125 = scmp.eq.s32.totalorder %s30, 3
      %p126 = por %p124, %p125
      %p127 = scmp.ne.s32.totalorder %s116, %s117
      %p128 = scmp.eq.s32.totalorder %s30, 0
      %p129 = por %p127, %p128
      %p130 = scmp.ne.s32.totalorder %s116, %s117
      %p131 = scmp.eq.s32.totalorder %s31, 3
      %p132 = por %p130, %p131
      %p134 = scmp.ne.s32.totalorder %s117, %s133
      %p135 = scmp.eq.s32.totalorder %s31, 0
      %p136 = por %p134, %p135
      %s137 = ssub.s32 %s25, %s32
      %p138 = scmp.eq.s32.totalorder %s137, 0
      %s140 = sadd.s32 %s139, 1
      %s141 = scalar_select %p138, %s139, %s140
      %p144 = pneg %p138
      %p145 = scmp.eq.s32.totalorder %s25, 3
      %p146 = por %p144, %p145
      %p147 = scmp.ne.s32.totalorder %s139, %s142
      %p148 = scmp.eq.s32.totalorder %s25, 0
      %p149 = por %p147, %p148
      %p150 = scmp.ne.s32.totalorder %s139, %s142
      %p151 = scmp.eq.s32.totalorder %s30, 3
      %p152 = por %p150, %p151
      %p153 = scmp.ne.s32.totalorder %s142, %s143
      %p154 = scmp.eq.s32.totalorder %s30, 0
      %p155 = por %p153, %p154
      %p156 = scmp.ne.s32.totalorder %s142, %s143
      %p157 = scmp.eq.s32.totalorder %s31, 3
      %p158 = por %p156, %p157
      %p160 = scmp.ne.s32.totalorder %s143, %s159
      %p161 = scmp.eq.s32.totalorder %s31, 0
      %p162 = por %p160, %p161
      %s164 = sadd.s32 %s163, 1
      %p167 = scmp.eq.s32.totalorder %s25, 3
      %p168 = scmp.ne.s32.totalorder %s163, %s165
      %p169 = scmp.eq.s32.totalorder %s25, 0
      %p170 = por %p168, %p169
      %p171 = scmp.ne.s32.totalorder %s163, %s165
      %p172 = scmp.eq.s32.totalorder %s30, 3
      %p173 = por %p171, %p172
      %p174 = scmp.ne.s32.totalorder %s165, %s166
      %p175 = scmp.eq.s32.totalorder %s30, 0
      %p176 = por %p174, %p175
      %p177 = scmp.ne.s32.totalorder %s165, %s166
      %p178 = scmp.eq.s32.totalorder %s31, 3
      %p179 = por %p177, %p178
      %p181 = scmp.ne.s32.totalorder %s166, %s180
      %p182 = scmp.eq.s32.totalorder %s31, 0
      %p183 = por %p181, %p182
      %s185 = sadd.s32 %s184, 1
      %p188 = scmp.eq.s32.totalorder %s25, 3
      %p189 = scmp.ne.s32.totalorder %s184, %s186
      %p190 = scmp.eq.s32.totalorder %s25, 0
      %p191 = por %p189, %p190
      %p192 = scmp.ne.s32.totalorder %s184, %s186
      %p193 = scmp.eq.s32.totalorder %s30, 3
      %p194 = por %p192, %p193
      %p195 = scmp.ne.s32.totalorder %s186, %s187
      %p196 = scmp.eq.s32.totalorder %s30, 0
      %p197 = por %p195, %p196
      %p198 = scmp.ne.s32.totalorder %s186, %s187
      %p199 = scmp.eq.s32.totalorder %s31, 3
      %p200 = por %p198, %p199
      %p202 = scmp.ne.s32.totalorder %s187, %s201
      %p203 = scmp.eq.s32.totalorder %s31, 0
      %p204 = por %p202, %p203
      %s206 = sadd.s32 %s205, 1
      %p209 = scmp.eq.s32.totalorder %s25, 3
      %p210 = scmp.ne.s32.totalorder %s205, %s207
      %p211 = scmp.eq.s32.totalorder %s25, 0
      %p212 = por %p210, %p211
      %p213 = scmp.ne.s32.totalorder %s205, %s207
      %p214 = scmp.eq.s32.totalorder %s30, 3
      %p215 = por %p213, %p214
      %p216 = scmp.ne.s32.totalorder %s207, %s208
      %p217 = scmp.eq.s32.totalorder %s30, 0
      %p218 = por %p216, %p217
      %p219 = scmp.ne.s32.totalorder %s207, %s208
      %p220 = scmp.eq.s32.totalorder %s31, 3
      %p221 = por %p219, %p220
      %p223 = scmp.ne.s32.totalorder %s208, %s222
      %p224 = scmp.eq.s32.totalorder %s31, 0
      %p225 = por %p223, %p224
      %s227 = sadd.s32 %s226, 1
      %p230 = scmp.eq.s32.totalorder %s25, 3
      %p231 = scmp.ne.s32.totalorder %s226, %s228
      %p232 = scmp.eq.s32.totalorder %s25, 0
      %p233 = por %p231, %p232
      %p234 = scmp.ne.s32.totalorder %s226, %s228
      %p235 = scmp.eq.s32.totalorder %s30, 3
      %p236 = por %p234, %p235
      %p237 = scmp.ne.s32.totalorder %s228, %s229
      %p238 = scmp.eq.s32.totalorder %s30, 0
      %p239 = por %p237, %p238
      %p240 = scmp.ne.s32.totalorder %s228, %s229
      %p241 = scmp.eq.s32.totalorder %s31, 3
      %p242 = por %p240, %p241
      %p244 = scmp.ne.s32.totalorder %s229, %s243
      %p245 = scmp.eq.s32.totalorder %s31, 0
      %p246 = por %p244, %p245
      %s247 = ssub.s32 %s25, %s32
      %p248 = scmp.eq.s32.totalorder %s247, 0
      %s250 = sadd.s32 %s249, 1
      %s251 = scalar_select %p248, %s249, %s250
      %p254 = pneg %p248
      %p255 = scmp.eq.s32.totalorder %s25, 3
      %p256 = por %p254, %p255
      %p257 = scmp.ne.s32.totalorder %s249, %s252
      %p258 = scmp.eq.s32.totalorder %s25, 0
      %p259 = por %p257, %p258
      %p260 = scmp.ne.s32.totalorder %s249, %s252
      %p261 = scmp.eq.s32.totalorder %s30, 3
      %p262 = por %p260, %p261
      %p263 = scmp.ne.s32.totalorder %s252, %s253
      %p264 = scmp.eq.s32.totalorder %s30, 0
      %p265 = por %p263, %p264
      %p266 = scmp.ne.s32.totalorder %s252, %s253
      %p267 = scmp.eq.s32.totalorder %s31, 3
      %p268 = por %p266, %p267
      %p270 = scmp.ne.s32.totalorder %s253, %s269
      %p271 = scmp.eq.s32.totalorder %s31, 0
      %p272 = por %p270, %p271
      %p273 = scmp.le.s32.totalorder 1, %s25
      %p274 = scmp.lt.s32.totalorder %s25, 5
      %p275 = pnand %p273, %p274
      %p276 = pneg %p275
      // Predicated region
      $region9: #{tpu_custom_call.1} parent=5 // pred_check
        _
      $region10: #{tpu_custom_call.1} parent=5 // pred_check_branch
        %278 = sbr.rel (%p275) target = $region12
      $region11: #{tpu_custom_call.1} parent=5 // pred_region
        %s279 = ssub.s32 %s25, 1
        // Predicated region
        $region13: #{tpu_custom_call.1} parent=11 // pred_check
          %p280 = pneg %p176
        $region14: #{tpu_custom_call.1} parent=11 // pred_check_branch
          %282 = sbr.rel (%p280) target = $region16
        $region15: #{tpu_custom_call.1} parent=11 // pred_region
          _
        $region16: #{tpu_custom_call.1} parent=11 // pred_fallthru
          _
        // Predicated region
        $region17: #{tpu_custom_call.1} parent=11 // pred_check
          %p283 = pneg %p197
        $region18: #{tpu_custom_call.1} parent=11 // pred_check_branch
          %285 = sbr.rel (%p283) target = $region20
        $region19: #{tpu_custom_call.1} parent=11 // pred_region
          %s287 = ssub.s32 640, 640
          %288 = vsyncadd [#allocation9], %s287
          %s289 = sshll.u32 [#allocation8], 4
          %s290 = int_to_ptr.vmem [resolvable:$true] %s289
          %295 = dma.hbm_to_vmem [thread:$0]  %s6, 640, %s290, [#allocation9], 64, 64, 4
        $region20: #{tpu_custom_call.1} parent=11 // pred_fallthru
          _
        // Predicated region
        $region21: #{tpu_custom_call.1} parent=11 // pred_check
          %p296 = pneg %p218
        $region22: #{tpu_custom_call.1} parent=11 // pred_check_branch
          %298 = sbr.rel (%p296) target = $region24
        $region23: #{tpu_custom_call.1} parent=11 // pred_region
          %s300 = ssub.s32 6144, 6144
          %301 = vsyncadd [#allocation9], %s300
          %s302 = sshll.u32 [#allocation10], 4
          %s303 = int_to_ptr.vmem [resolvable:$true] %s302
          %308 = dma.hbm_to_vmem [thread:$0]  %s7, 6144, %s303, [#allocation9], 64, 64, 4
        $region24: #{tpu_custom_call.1} parent=11 // pred_fallthru
          _
        // Predicated region
        $region25: #{tpu_custom_call.1} parent=11 // pred_check
          %p309 = pneg %p239
        $region26: #{tpu_custom_call.1} parent=11 // pred_check_branch
          %311 = sbr.rel (%p309) target = $region28
        $region27: #{tpu_custom_call.1} parent=11 // pred_region
          _
        $region28: #{tpu_custom_call.1} parent=11 // pred_fallthru
          _
      $region12: #{tpu_custom_call.1} parent=5 // pred_fallthru
        _
      %p312 = scmp.lt.s32.totalorder %s25, 4
      // Predicated region
      $region29: #{tpu_custom_call.1} parent=5 // pred_check
        %p313 = pneg %p312
      $region30: #{tpu_custom_call.1} parent=5 // pred_check_branch
        %315 = sbr.rel (%p313) target = $region32
      $region31: #{tpu_custom_call.1} parent=5 // pred_region
        // Predicated region
        $region33: #{tpu_custom_call.1} parent=31 // pred_check
          %p316 = pneg %p45
        $region34: #{tpu_custom_call.1} parent=31 // pred_check_branch
          %318 = sbr.rel (%p316) target = $region36
        $region35: #{tpu_custom_call.1} parent=31 // pred_region
          %s319 = sand.u32 %s35, 1
          %s320 = scalar_lea.sflag [#allocation3], %s319
          %s321 = sand.u32 %s35, 1
          %s322 = smul.addr %s321, 8
          %s323 = scalar_lea.vmem [#allocation2], %s322
          %s325 = ssub.s32 128, 128
          %326 = vsyncadd %s320, %s325
          %s327 = smul.addr %s25, 2
          %s328 = smul.addr %s327, 64
          %s329 = scalar_lea.hbm %s0, %s328
          %s330 = sshll.u32 %s323, 4
          %s331 = int_to_ptr.vmem [resolvable:$true] %s330
          %336 = dma.hbm_to_vmem [thread:$0]  %s329, 128, %s331, %s320, 64, 64, 4
        $region36: #{tpu_custom_call.1} parent=31 // pred_fallthru
          _
        // Predicated region
        $region37: #{tpu_custom_call.1} parent=31 // pred_check
          %p337 = pneg %p71
        $region38: #{tpu_custom_call.1} parent=31 // pred_check_branch
          %339 = sbr.rel (%p337) target = $region40
        $region39: #{tpu_custom_call.1} parent=31 // pred_region
          %p340 = scmp.lt.s32.totalorder %s25, 3
          %s341 = scalar_select %p340, %s25, 3
          %s342 = smul.addr %s341, 4
          %s343 = smul.addr %s342, 4
          %s344 = scalar_lea.vmem %s1, %s343
        $region40: #{tpu_custom_call.1} parent=31 // pred_fallthru
          _
        // Predicated region
        $region41: #{tpu_custom_call.1} parent=31 // pred_check
          %p345 = pneg %p97
        $region42: #{tpu_custom_call.1} parent=31 // pred_check_branch
          %347 = sbr.rel (%p345) target = $region44
        $region43: #{tpu_custom_call.1} parent=31 // pred_region
          %p348 = scmp.lt.s32.totalorder %s25, 3
          %s349 = scalar_select %p348, %s25, 3
          %s350 = smul.addr %s349, 4
          %s351 = smul.addr %s350, 4
          %s352 = scalar_lea.vmem %s2, %s351
        $region44: #{tpu_custom_call.1} parent=31 // pred_fallthru
          _
        // Predicated region
        $region45: #{tpu_custom_call.1} parent=31 // pred_check
          %p353 = pneg %p123
        $region46: #{tpu_custom_call.1} parent=31 // pred_check_branch
          %355 = sbr.rel (%p353) target = $region48
        $region47: #{tpu_custom_call.1} parent=31 // pred_region
          %s356 = sand.u32 %s25, 1
          %s357 = scalar_lea.sflag [#allocation6], %s356
          %s358 = sand.u32 %s113, 1
          %s359 = smul.addr %s358, 8
          %s360 = scalar_lea.vmem [#allocation5], %s359
          %s362 = ssub.s32 128, 128
          %363 = vsyncadd %s357, %s362
          %s364 = smul.addr %s25, 2
          %s365 = smul.addr %s364, 64
          %s366 = scalar_lea.hbm %s3, %s365
          %s367 = sshll.u32 %s360, 4
          %s368 = int_to_ptr.vmem [resolvable:$true] %s367
          %373 = dma.hbm_to_vmem [thread:$0]  %s366, 128, %s368, %s357, 64, 64, 4
        $region48: #{tpu_custom_call.1} parent=31 // pred_fallthru
          _
        // Predicated region
        $region49: #{tpu_custom_call.1} parent=31 // pred_check
          %p374 = pneg %p149
        $region50: #{tpu_custom_call.1} parent=31 // pred_check_branch
          %376 = sbr.rel (%p374) target = $region52
        $region51: #{tpu_custom_call.1} parent=31 // pred_region
          %s377 = sand.u32 %s25, 1
          %s378 = scalar_lea.sflag [#allocation6], %s377
          %s379 = sand.u32 %s139, 1
          %s380 = smul.addr %s379, 16
          %s381 = scalar_lea.vmem [#allocation7], %s380
          %s383 = ssub.s32 256, 256
          %384 = vsyncadd %s378, %s383
          %s385 = smul.addr %s25, 2
          %s386 = smul.addr %s385, 128
          %s387 = scalar_lea.hbm %s4, %s386
          %s388 = sshll.u32 %s381, 4
          %s389 = int_to_ptr.vmem [resolvable:$true] %s388
          %394 = dma.hbm_to_vmem [thread:$0]  %s387, 256, %s389, %s378, 128, 128, 8
        $region52: #{tpu_custom_call.1} parent=31 // pred_fallthru
          _
      $region32: #{tpu_custom_call.1} parent=5 // pred_fallthru
        _
      %p395 = scmp.le.s32.totalorder 1, %s25
      %p396 = scmp.lt.s32.totalorder %s25, 5
      %p397 = pnand %p395, %p396
      %p398 = pneg %p397
      // Predicated region
      $region53: #{tpu_custom_call.1} parent=5 // pred_check
        _
      $region54: #{tpu_custom_call.1} parent=5 // pred_check_branch
        %400 = sbr.rel (%p397) target = $region56
      $region55: #{tpu_custom_call.1} parent=5 // pred_region
        %s401 = ssub.s32 %s25, 1
        %s402 = sand.u32 %s38, 1
        %s403 = scalar_lea.sflag [#allocation3], %s402
        %s404 = sand.u32 %s38, 1
        %s405 = smul.addr %s404, 8
        %s406 = scalar_lea.vmem [#allocation2], %s405
        // Predicated region
        $region57: #{tpu_custom_call.1} parent=55 // pred_check
          %p407 = pneg %p51
        $region58: #{tpu_custom_call.1} parent=55 // pred_check_branch
          %409 = sbr.rel (%p407) target = $region60
        $region59: #{tpu_custom_call.1} parent=55 // pred_region
          %410 = dma.done %s403, 128
        $region60: #{tpu_custom_call.1} parent=55 // pred_fallthru
          _
        %s411 = sand.u32 %s30, 1
        %s412 = scalar_lea.sflag [#allocation6], %s411
        %s413 = sand.u32 %s116, 1
        %s414 = smul.addr %s413, 8
        %s415 = scalar_lea.vmem [#allocation5], %s414
        // Predicated region
        $region61: #{tpu_custom_call.1} parent=55 // pred_check
          %p416 = pneg %p129
        $region62: #{tpu_custom_call.1} parent=55 // pred_check_branch
          %418 = sbr.rel (%p416) target = $region64
        $region63: #{tpu_custom_call.1} parent=55 // pred_region
          %419 = dma.done %s412, 128
        $region64: #{tpu_custom_call.1} parent=55 // pred_fallthru
          _
        %s420 = sand.u32 %s30, 1
        %s421 = scalar_lea.sflag [#allocation6], %s420
        %s422 = sand.u32 %s142, 1
        %s423 = smul.addr %s422, 16
        %s424 = scalar_lea.vmem [#allocation7], %s423
        // Predicated region
        $region65: #{tpu_custom_call.1} parent=55 // pred_check
          %p425 = pneg %p155
        $region66: #{tpu_custom_call.1} parent=55 // pred_check_branch
          %427 = sbr.rel (%p425) target = $region68
        $region67: #{tpu_custom_call.1} parent=55 // pred_region
          %428 = dma.done %s421, 256
        $region68: #{tpu_custom_call.1} parent=55 // pred_fallthru
          _
        // Predicated region
        $region69: #{tpu_custom_call.1} parent=55 // pred_check
          %p429 = pneg %p197
        $region70: #{tpu_custom_call.1} parent=55 // pred_check_branch
          %431 = sbr.rel (%p429) target = $region72
        $region71: #{tpu_custom_call.1} parent=55 // pred_region
          %432 = dma.done [#allocation9], 640
        $region72: #{tpu_custom_call.1} parent=55 // pred_fallthru
          _
        // Predicated region
        $region73: #{tpu_custom_call.1} parent=55 // pred_check
          %p433 = pneg %p218
        $region74: #{tpu_custom_call.1} parent=55 // pred_check_branch
          %435 = sbr.rel (%p433) target = $region76
        $region75: #{tpu_custom_call.1} parent=55 // pred_region
          %436 = dma.done [#allocation9], 6144
        $region76: #{tpu_custom_call.1} parent=55 // pred_fallthru
          _
        %s437 = sand.u32 %s38, 1
        %s438 = scalar_lea.sflag [#allocation3], %s437
        %s439 = sand.u32 %s38, 1
        %s440 = smul.addr %s439, 8
        %s441 = scalar_lea.vmem [#allocation2], %s440
        %p442 = pneg %p51
        %p443 = pneg %p48
        %p444 = scmp.lt.s32.totalorder %s30, 3
        %s445 = scalar_select %p444, %s30, 3
        %s446 = smul.addr %s445, 4
        %s447 = smul.addr %s446, 4
        %s448 = scalar_lea.vmem %s1, %s447
        %p449 = pneg %p77
        %p450 = pneg %p74
        %p451 = scmp.lt.s32.totalorder %s30, 3
        %s452 = scalar_select %p451, %s30, 3
        %s453 = smul.addr %s452, 4
        %s454 = smul.addr %s453, 4
        %s455 = scalar_lea.vmem %s2, %s454
        %p456 = pneg %p103
        %p457 = pneg %p100
        %s458 = sand.u32 %s30, 1
        %s459 = scalar_lea.sflag [#allocation6], %s458
        %s460 = sand.u32 %s116, 1
        %s461 = smul.addr %s460, 8
        %s462 = scalar_lea.vmem [#allocation5], %s461
        %p463 = pneg %p129
        %p464 = pneg %p126
        %s465 = sand.u32 %s30, 1
        %s466 = scalar_lea.sflag [#allocation6], %s465
        %s467 = sand.u32 %s142, 1
        %s468 = smul.addr %s467, 16
        %s469 = scalar_lea.vmem [#allocation7], %s468
        %p470 = pneg %p155
        %p471 = pneg %p152
        %p472 = pneg %p176
        %p473 = pneg %p173
        %p474 = pneg %p197
        %p475 = pneg %p194
        %p476 = pneg %p218
        %p477 = pneg %p215
        %p478 = pneg %p239
        %p479 = pneg %p236
        %p480 = pneg %p265
        %p481 = pneg %p262
        %s482 = sand.u32 %s252, 1
        %s483 = scalar_lea.sflag [#allocation4], %s482
        %s484 = sand.u32 %s252, 1
        %s485 = smul.addr %s484, 16
        %s486 = scalar_lea.vmem [#allocation11], %s485
        %p487 = scmp.lt.s32.totalorder %s30, 3
        %s488 = scalar_select %p487, %s30, 3
        %s489 = smul.addr %s488, 4
        %s490 = smul.addr %s489, 4
        %s491 = scalar_lea.vmem %s1, %s490
        %p492 = scmp.lt.s32.totalorder %s30, 3
        %s493 = scalar_select %p492, %s30, 3
        %s494 = smul.addr %s493, 4
        %s495 = smul.addr %s494, 4
        %s496 = scalar_lea.vmem %s2, %s495
        %v498 = vld [vmem:[%s491] sm:$0xf]
        %v499 = vld [vmem:[%s491 + $0x4] sm:$0xf]
        %v500 = vld [vmem:[%s491 + $0x8] sm:$0xf]
        %v501 = vld [vmem:[%s491 + $0xc] sm:$0xf]
        %v502 = vld [vmem:[%s496] sm:$0xf]
        %v503 = vld [vmem:[%s496 + $0x4] sm:$0xf]
        %v504 = vld [vmem:[%s496 + $0x8] sm:$0xf]
        %v505 = vld [vmem:[%s496 + $0xc] sm:$0xf]
        %v506 = vld [vmem:[%s415] sm:$0xf]
        %v507 = vld [vmem:[%s415 + $0x4] sm:$0xf]
        %v508 = vld [vmem:[%s424] sm:$0xff]
        %v509 = vld [vmem:[%s424 + $0x8] sm:$0xff]
        %v510 = vld [vmem:[%s406] sm:$0xf]
        %v511 = vld [vmem:[%s406 + $0x4] sm:$0xf]
        %v514 = vunpack.c.l.b16 %v510
        %v515 = vunpack.c.l.b16 %v511
        %v516 = vpack.c.b16 %v515, %v514
        loop: start=0, step=1, limit=5
        $region77: #{tpu_custom_call.1} parent=55 // loop_pre_header
          _
        $region78: #{tpu_custom_call.1} parent=55 // loop_header
          %s519 = sphi 0, %s523
          %p520 = scmp.ge.s32.totalorder %s519, 5
          %v524 = vphi %v516, %v926
        $region79: #{tpu_custom_call.1} parent=55 // loop_header_branch
          %522 = sbr.rel (%p520) target = $region83
        $region80: #{tpu_custom_call.1} parent=55 // loop_body
          %s525 = smul.u32 %s519, 8
          %s526 = smul.addr %s525, 4
          %s527 = scalar_lea.vmem %s5, %s526
          %v528 = vld [vmem:[%s527] sm:$0xff]
          %v529 = vld [vmem:[%s527 + $0x8] sm:$0xff]
          %v530 = vld [vmem:[%s527 + $0x10] sm:$0xff]
          %v531 = vld [vmem:[%s527 + $0x18] sm:$0xff]
          %v536 = vunpack.c.l.b16 %v528
          %v537 = vunpack.c.h.b16 %v528
          %v538 = vunpack.c.l.b16 %v529
          %v539 = vunpack.c.h.b16 %v529
          %v540 = vunpack.c.l.b16 %v530
          %v541 = vunpack.c.h.b16 %v530
          %v542 = vunpack.c.l.b16 %v531
          %v543 = vunpack.c.h.b16 %v531
          %v544 = vpack.c.b16 %v538, %v536
          %v545 = vpack.c.b16 %v539, %v537
          %v546 = vpack.c.b16 %v542, %v540
          %v547 = vpack.c.b16 %v543, %v541
          %vm552 = vcmask 261120
          %v554 = vsel %vm552, %v524, 0
          %556 = vmatprep.subr.bf16.mxu0 %v545
          %557 = vmatpush1.bf16.msra.mxu0 %v544
          %558 = vmatprep.subr.bf16.mxu0 %v547
          %559 = vmatpush1.bf16.msra.mxu0 %v546
          %560 = vmatprep.subr.bf16.mxu0 0
          %561 = vmatpush1.bf16.msra.mxu0 0
          %562 = vmatprep.subr.bf16.mxu0 0
          %563 = vmatpush1.bf16.msra.mxu0 0
          %564 = vmatprep.subr.bf16.mxu0 0
          %565 = vmatpush1.bf16.msra.mxu0 0
          %566 = vmatprep.subr.bf16.mxu0 0
          %567 = vmatpush1.bf16.msra.mxu0 0
          %568 = vmatprep.subr.bf16.mxu0 0
          %569 = vmatpush1.bf16.msra.mxu0 0
          %570 = vmatprep.subr.bf16.mxu0 0
          %571 = vmatpush1.bf16.msra.mxu0 0
          %572 = vmatprep.subr.bf16.mxu0 0
          %573 = vmatpush1.bf16.msra.mxu0 0
          %574 = vmatprep.subr.bf16.mxu0 0
          %575 = vmatpush1.bf16.msra.mxu0 0
          %576 = vmatprep.subr.bf16.mxu0 0
          %577 = vmatpush1.bf16.msra.mxu0 0
          %578 = vmatprep.subr.bf16.mxu0 0
          %579 = vmatpush1.bf16.msra.mxu0 0
          %580 = vmatprep.subr.bf16.mxu0 0
          %581 = vmatpush1.bf16.msra.mxu0 0
          %582 = vmatprep.subr.bf16.mxu0 0
          %583 = vmatpush1.bf16.msra.mxu0 0
          %584 = vmatprep.subr.bf16.mxu0 0
          %585 = vmatpush1.bf16.msra.mxu0 0
          %586 = vmatprep.subr.bf16.mxu0 0
          %587 = vmatpush1.bf16.msra.mxu0 0
          %588 = vmatprep.mubr.bf16.mxu0 0
          %589 = vmatmul.mubr.bf16.gmra.mrb[0].mxu0 %v554
          %v590 = vpop.f32.mrb[0].mxu0
          %v591 = vadd.f32 0.0, %v590
          %v592 = vpop.f32.mrb[0].mxu0
          %v593 = vadd.f32 0.0, %v592
          %v594 = vpop.f32.mrb[0].mxu0
          %v595 = vadd.f32 0.0, %v594
          %v596 = vpop.f32.mrb[0].mxu0
          %v597 = vadd.f32 0.0, %v596
          %598 = vdwg.mxu0
          %v599 = vpack.c.bf16 %v595, %v591
          %s600 = smul.u32 %s519, 2
          %s601 = smul.addr %s600, 4
          %s602 = scalar_lea.vmem [#allocation8], %s601
          %v603 = vld [vmem:[%s602] sm:$0xf]
          %v604 = vld [vmem:[%s602 + $0x4] sm:$0xf]
          %v609 = vunpack.c.l.b16 %v498
          %v610 = vunpack.c.l.b16 %v499
          %v611 = vunpack.c.l.b16 %v500
          %v612 = vunpack.c.l.b16 %v501
          %v613 = vpack.c.b16 %v610, %v609
          %v614 = vpack.c.b16 %v612, %v611
          %v617 = vunpack.c.l.b16 %v603
          %v618 = vunpack.c.l.b16 %v604
          %v619 = vpack.c.b16 %v618, %v617
          %vm621 = vcmask 130048
          %v623 = vsel %vm621, %v613, 0
          %v626 = vsel %vm621, %v614, 0
          %628 = vmatprep.subr.bf16.mxu0 0
          %629 = vmatpush1.bf16.msra.mxu0 %v619
          %630 = vmatprep.subr.bf16.mxu0 0
          %631 = vmatpush1.bf16.msra.mxu0 0
          %632 = vmatprep.subr.bf16.mxu0 0
          %633 = vmatpush1.bf16.msra.mxu0 0
          %634 = vmatprep.subr.bf16.mxu0 0
          %635 = vmatpush1.bf16.msra.mxu0 0
          %636 = vmatprep.subr.bf16.mxu0 0
          %637 = vmatpush1.bf16.msra.mxu0 0
          %638 = vmatprep.subr.bf16.mxu0 0
          %639 = vmatpush1.bf16.msra.mxu0 0
          %640 = vmatprep.subr.bf16.mxu0 0
          %641 = vmatpush1.bf16.msra.mxu0 0
          %642 = vmatprep.subr.bf16.mxu0 0
          %643 = vmatpush1.bf16.msra.mxu0 0
          %644 = vmatprep.subr.bf16.mxu0 0
          %645 = vmatpush1.bf16.msra.mxu0 0
          %646 = vmatprep.subr.bf16.mxu0 0
          %647 = vmatpush1.bf16.msra.mxu0 0
          %648 = vmatprep.subr.bf16.mxu0 0
          %649 = vmatpush1.bf16.msra.mxu0 0
          %650 = vmatprep.subr.bf16.mxu0 0
          %651 = vmatpush1.bf16.msra.mxu0 0
          %652 = vmatprep.subr.bf16.mxu0 0
          %653 = vmatpush1.bf16.msra.mxu0 0
          %654 = vmatprep.subr.bf16.mxu0 0
          %655 = vmatpush1.bf16.msra.mxu0 0
          %656 = vmatprep.subr.bf16.mxu0 0
          %657 = vmatpush1.bf16.msra.mxu0 0
          %658 = vmatprep.subr.bf16.mxu0 0
          %659 = vmatpush1.bf16.msra.mxu0 0
          %660 = vmatprep.mubr.bf16.mxu0 0
          %661 = vmatmul.mubr.bf16.gmra.mrb[0].mxu0 %v623
          %v662 = vpop.f32.mrb[0].mxu0
          %v663 = vadd.f32 0.0, %v662
          %v664 = vpop.f32.mrb[0].mxu0
          %v665 = vpop.f32.mrb[0].mxu0
          %v666 = vadd.f32 0.0, %v665
          %v667 = vpop.f32.mrb[0].mxu0
          %668 = vmatprep.mubr.bf16.mxu0 0
          %669 = vmatmul.mubr.bf16.gmra.mrb[0].mxu0 %v626
          %v670 = vpop.f32.mrb[0].mxu0
          %v671 = vadd.f32 0.0, %v670
          %v672 = vpop.f32.mrb[0].mxu0
          %v673 = vpop.f32.mrb[0].mxu0
          %v674 = vadd.f32 0.0, %v673
          %v675 = vpop.f32.mrb[0].mxu0
          %676 = vdwg.mxu0
          %v681 = vunpack.c.l.b16 %v502
          %v682 = vunpack.c.l.b16 %v503
          %v683 = vunpack.c.l.b16 %v504
          %v684 = vunpack.c.l.b16 %v505
          %v685 = vpack.c.b16 %v682, %v681
          %v686 = vpack.c.b16 %v684, %v683
          %v688 = vsel %vm621, %v685, 0
          %v691 = vsel %vm621, %v686, 0
          %693 = vmatprep.subr.bf16.mxu0 0
          %694 = vmatpush1.bf16.msra.mxu0 %v599
          %695 = vmatprep.subr.bf16.mxu0 0
          %696 = vmatpush1.bf16.msra.mxu0 0
          %697 = vmatprep.subr.bf16.mxu0 0
          %698 = vmatpush1.bf16.msra.mxu0 0
          %699 = vmatprep.subr.bf16.mxu0 0
          %700 = vmatpush1.bf16.msra.mxu0 0
          %701 = vmatprep.subr.bf16.mxu0 0
          %702 = vmatpush1.bf16.msra.mxu0 0
          %703 = vmatprep.subr.bf16.mxu0 0
          %704 = vmatpush1.bf16.msra.mxu0 0
          %705 = vmatprep.subr.bf16.mxu0 0
          %706 = vmatpush1.bf16.msra.mxu0 0
          %707 = vmatprep.subr.bf16.mxu0 0
          %708 = vmatpush1.bf16.msra.mxu0 0
          %709 = vmatprep.subr.bf16.mxu0 0
          %710 = vmatpush1.bf16.msra.mxu0 0
          %711 = vmatprep.subr.bf16.mxu0 0
          %712 = vmatpush1.bf16.msra.mxu0 0
          %713 = vmatprep.subr.bf16.mxu0 0
          %714 = vmatpush1.bf16.msra.mxu0 0
          %715 = vmatprep.subr.bf16.mxu0 0
          %716 = vmatpush1.bf16.msra.mxu0 0
          %717 = vmatprep.subr.bf16.mxu0 0
          %718 = vmatpush1.bf16.msra.mxu0 0
          %719 = vmatprep.subr.bf16.mxu0 0
          %720 = vmatpush1.bf16.msra.mxu0 0
          %721 = vmatprep.subr.bf16.mxu0 0
          %722 = vmatpush1.bf16.msra.mxu0 0
          %723 = vmatprep.subr.bf16.mxu0 0
          %724 = vmatpush1.bf16.msra.mxu0 0
          %725 = vmatprep.mubr.bf16.mxu0 0
          %726 = vmatmul.mubr.bf16.gmra.mrb[0].mxu0 %v688
          %v727 = vpop.f32.mrb[0].mxu0
          %v728 = vadd.f32 %v663, %v727
          %v729 = vpop.f32.mrb[0].mxu0
          %v730 = vpop.f32.mrb[0].mxu0
          %v731 = vadd.f32 %v666, %v730
          %v732 = vpop.f32.mrb[0].mxu0
          %733 = vmatprep.mubr.bf16.mxu0 0
          %734 = vmatmul.mubr.bf16.gmra.mrb[0].mxu0 %v691
          %v735 = vpop.f32.mrb[0].mxu0
          %v736 = vadd.f32 %v671, %v735
          %v737 = vpop.f32.mrb[0].mxu0
          %v738 = vpop.f32.mrb[0].mxu0
          %v739 = vadd.f32 %v674, %v738
          %v740 = vpop.f32.mrb[0].mxu0
          %741 = vdwg.mxu0
          %v742 = vmul.f32 %v728, 0.01
          %v743 = vmul.f32 %v731, 0.01
          %v744 = vmul.f32 %v736, 0.01
          %v745 = vmul.f32 %v739, 0.01
          %v746 = vmax.f32 %v728, %v742
          %v747 = vmax.f32 %v731, %v743
          %v748 = vmax.f32 %v736, %v744
          %v749 = vmax.f32 %v739, %v745
          %v750 = vpack.c.bf16 %v747, %v746
          %v751 = vpack.c.bf16 %v749, %v748
          %v754 = vunpack.c.l.b16 %v506
          %v755 = vunpack.c.l.b16 %v507
          %v756 = vpack.c.b16 %v755, %v754
          %v758 = vsel %vm552, %v756, 0
          %760 = vmatprep.subr.bf16.mxu0 0
          %761 = vmatpush1.bf16.msra.mxu0 %v750
          %762 = vmatprep.subr.bf16.mxu0 0
          %763 = vmatpush1.bf16.msra.mxu0 %v751
          %764 = vmatprep.subr.bf16.mxu0 0
          %765 = vmatpush1.bf16.msra.mxu0 0
          %766 = vmatprep.subr.bf16.mxu0 0
          %767 = vmatpush1.bf16.msra.mxu0 0
          %768 = vmatprep.subr.bf16.mxu0 0
          %769 = vmatpush1.bf16.msra.mxu0 0
          %770 = vmatprep.subr.bf16.mxu0 0
          %771 = vmatpush1.bf16.msra.mxu0 0
          %772 = vmatprep.subr.bf16.mxu0 0
          %773 = vmatpush1.bf16.msra.mxu0 0
          %774 = vmatprep.subr.bf16.mxu0 0
          %775 = vmatpush1.bf16.msra.mxu0 0
          %776 = vmatprep.subr.bf16.mxu0 0
          %777 = vmatpush1.bf16.msra.mxu0 0
          %778 = vmatprep.subr.bf16.mxu0 0
          %779 = vmatpush1.bf16.msra.mxu0 0
          %780 = vmatprep.subr.bf16.mxu0 0
          %781 = vmatpush1.bf16.msra.mxu0 0
          %782 = vmatprep.subr.bf16.mxu0 0
          %783 = vmatpush1.bf16.msra.mxu0 0
          %784 = vmatprep.subr.bf16.mxu0 0
          %785 = vmatpush1.bf16.msra.mxu0 0
          %786 = vmatprep.subr.bf16.mxu0 0
          %787 = vmatpush1.bf16.msra.mxu0 0
          %788 = vmatprep.subr.bf16.mxu0 0
          %789 = vmatpush1.bf16.msra.mxu0 0
          %790 = vmatprep.subr.bf16.mxu0 0
          %791 = vmatpush1.bf16.msra.mxu0 0
          %792 = vmatprep.mubr.bf16.mxu0 0
          %793 = vmatmul.mubr.bf16.gmra.mrb[0].mxu0 %v758
          %v794 = vpop.f32.mrb[0].mxu0
          %v795 = vadd.f32 0.0, %v794
          %v796 = vpop.f32.mrb[0].mxu0
          %v797 = vpop.f32.mrb[0].mxu0
          %v798 = vadd.f32 0.0, %v797
          %v799 = vpop.f32.mrb[0].mxu0
          %800 = vdwg.mxu0
          %v801 = vmul.f32 %v795, %v508
          %v802 = vmul.f32 %v798, %v509
          %v803 = vpack.c.bf16 %v802, %v801
          %s804 = smul.u32 %s519, 16
          %s805 = smul.addr %s804, 4
          %s806 = scalar_lea.vmem [#allocation10], %s805
          %v807 = vld [vmem:[%s806] sm:$0xf]
          %v808 = vld [vmem:[%s806 + $0x4] sm:$0xf]
          %v809 = vld [vmem:[%s806 + $0x8] sm:$0xf]
          %v810 = vld [vmem:[%s806 + $0xc] sm:$0xf]
          %v811 = vld [vmem:[%s806 + $0x10] sm:$0xf]
          %v812 = vld [vmem:[%s806 + $0x14] sm:$0xf]
          %v813 = vld [vmem:[%s806 + $0x18] sm:$0xf]
          %v814 = vld [vmem:[%s806 + $0x1c] sm:$0xf]
          %v815 = vld [vmem:[%s806 + $0x20] sm:$0xf]
          %v816 = vld [vmem:[%s806 + $0x24] sm:$0xf]
          %v817 = vld [vmem:[%s806 + $0x28] sm:$0xf]
          %v818 = vld [vmem:[%s806 + $0x2c] sm:$0xf]
          %v819 = vld [vmem:[%s806 + $0x30] sm:$0xf]
          %v820 = vld [vmem:[%s806 + $0x34] sm:$0xf]
          %v821 = vld [vmem:[%s806 + $0x38] sm:$0xf]
          %v822 = vld [vmem:[%s806 + $0x3c] sm:$0xf]
          %v839 = vunpack.c.l.b16 %v807
          %v840 = vunpack.c.l.b16 %v808
          %v841 = vunpack.c.l.b16 %v809
          %v842 = vunpack.c.l.b16 %v810
          %v843 = vunpack.c.l.b16 %v811
          %v844 = vunpack.c.l.b16 %v812
          %v845 = vunpack.c.l.b16 %v813
          %v846 = vunpack.c.l.b16 %v814
          %v847 = vunpack.c.l.b16 %v815
          %v848 = vunpack.c.l.b16 %v816
          %v849 = vunpack.c.l.b16 %v817
          %v850 = vunpack.c.l.b16 %v818
          %v851 = vunpack.c.l.b16 %v819
          %v852 = vunpack.c.l.b16 %v820
          %v853 = vunpack.c.l.b16 %v821
          %v854 = vunpack.c.l.b16 %v822
          %v855 = vpack.c.b16 %v840, %v839
          %v856 = vpack.c.b16 %v842, %v841
          %v857 = vpack.c.b16 %v844, %v843
          %v858 = vpack.c.b16 %v846, %v845
          %v859 = vpack.c.b16 %v848, %v847
          %v860 = vpack.c.b16 %v850, %v849
          %v861 = vpack.c.b16 %v852, %v851
          %v862 = vpack.c.b16 %v854, %v853
          %871 = vmatprep.subr.bf16.mxu0 0
          %872 = vmatpush1.bf16.msra.mxu0 %v855
          %873 = vmatprep.subr.bf16.mxu0 0
          %874 = vmatpush1.bf16.msra.mxu0 %v856
          %875 = vmatprep.subr.bf16.mxu0 0
          %876 = vmatpush1.bf16.msra.mxu0 %v857
          %877 = vmatprep.subr.bf16.mxu0 0
          %878 = vmatpush1.bf16.msra.mxu0 %v858
          %879 = vmatprep.subr.bf16.mxu0 0
          %880 = vmatpush1.bf16.msra.mxu0 %v859
          %881 = vmatprep.subr.bf16.mxu0 0
          %882 = vmatpush1.bf16.msra.mxu0 %v860
          %883 = vmatprep.subr.bf16.mxu0 0
          %884 = vmatpush1.bf16.msra.mxu0 %v861
          %885 = vmatprep.subr.bf16.mxu0 0
          %886 = vmatpush1.bf16.msra.mxu0 %v862
          %887 = vmatprep.subr.bf16.mxu0 0
          %888 = vmatpush1.bf16.msra.mxu0 0
          %889 = vmatprep.subr.bf16.mxu0 0
          %890 = vmatpush1.bf16.msra.mxu0 0
          %891 = vmatprep.subr.bf16.mxu0 0
          %892 = vmatpush1.bf16.msra.mxu0 0
          %893 = vmatprep.subr.bf16.mxu0 0
          %894 = vmatpush1.bf16.msra.mxu0 0
          %895 = vmatprep.subr.bf16.mxu0 0
          %896 = vmatpush1.bf16.msra.mxu0 0
          %897 = vmatprep.subr.bf16.mxu0 0
          %898 = vmatpush1.bf16.msra.mxu0 0
          %899 = vmatprep.subr.bf16.mxu0 0
          %900 = vmatpush1.bf16.msra.mxu0 0
          %901 = vmatprep.subr.bf16.mxu0 0
          %902 = vmatpush1.bf16.msra.mxu0 0
          %903 = vmatprep.mubr.bf16.mxu0 0
          %904 = vmatmul.mubr.bf16.gmra.mrb[0].mxu0 %v803
          %v905 = vpop.f32.mrb[0].mxu0
          %v906 = vadd.f32 0.0, %v905
          %v907 = vpop.f32.mrb[0].mxu0
          %v908 = vpop.f32.mrb[0].mxu0
          %v909 = vadd.f32 0.0, %v908
          %v910 = vpop.f32.mrb[0].mxu0
          %911 = vdwg.mxu0
          %v912 = vadd.f32 %v593, %v906
          %v913 = vadd.f32 %v597, %v909
          %s914 = scalar_lea.vmem %s8, %s519
          %v915 = vld [vmem:[%s914] sm:$0x1]
          %v917 = vlaneseq
          %v918 = vshrl.u32 %v917, 7
          %v919 = vsub.s32 0, %v918
          %v920 = vrot.slane %v915, %v919
          %v922 = vadd.f32 %v912, %v920
          %v923 = vadd.f32 %v913, %v920
          %v924 = vmax.f32 %v922, 0.0
          %v925 = vmax.f32 %v923, 0.0
          %v926 = vpack.c.bf16 %v925, %v924
        $region81: #{tpu_custom_call.1} parent=55 // loop_footer
          %s523 = sadd.s32 1, %s519
        $region82: #{tpu_custom_call.1} parent=55 // loop_footer_branch
          %518 = sbr.rel target = $region78
        $region83: #{tpu_custom_call.1} parent=55 // loop_exit
          _
        %s927 = scalar_lea.vmem %s5, 160
        %v928 = vld [vmem:[%s927] sm:$0xff]
        %v929 = vld [vmem:[%s927 + $0x8] sm:$0xff]
        %v930 = vld [vmem:[%s927 + $0x10] sm:$0xff]
        %v931 = vld [vmem:[%s927 + $0x18] sm:$0xff]
        %v936 = vunpack.c.l.b16 %v928
        %v937 = vunpack.c.h.b16 %v928
        %v938 = vunpack.c.l.b16 %v929
        %v939 = vunpack.c.h.b16 %v929
        %v940 = vunpack.c.l.b16 %v930
        %v941 = vunpack.c.h.b16 %v930
        %v942 = vunpack.c.l.b16 %v931
        %v943 = vunpack.c.h.b16 %v931
        %v944 = vpack.c.b16 %v938, %v936
        %v945 = vpack.c.b16 %v939, %v937
        %v946 = vpack.c.b16 %v942, %v940
        %v947 = vpack.c.b16 %v943, %v941
        %vm952 = vcmask 261120
        %v954 = vsel %vm952, %v524, 0
        %956 = vmatprep.subr.bf16.mxu0 %v945
        %957 = vmatpush1.bf16.msra.mxu0 %v944
        %958 = vmatprep.subr.bf16.mxu0 %v947
        %959 = vmatpush1.bf16.msra.mxu0 %v946
        %960 = vmatprep.subr.bf16.mxu0 0
        %961 = vmatpush1.bf16.msra.mxu0 0
        %962 = vmatprep.subr.bf16.mxu0 0
        %963 = vmatpush1.bf16.msra.mxu0 0
        %964 = vmatprep.subr.bf16.mxu0 0
        %965 = vmatpush1.bf16.msra.mxu0 0
        %966 = vmatprep.subr.bf16.mxu0 0
        %967 = vmatpush1.bf16.msra.mxu0 0
        %968 = vmatprep.subr.bf16.mxu0 0
        %969 = vmatpush1.bf16.msra.mxu0 0
        %970 = vmatprep.subr.bf16.mxu0 0
        %971 = vmatpush1.bf16.msra.mxu0 0
        %972 = vmatprep.subr.bf16.mxu0 0
        %973 = vmatpush1.bf16.msra.mxu0 0
        %974 = vmatprep.subr.bf16.mxu0 0
        %975 = vmatpush1.bf16.msra.mxu0 0
        %976 = vmatprep.subr.bf16.mxu0 0
        %977 = vmatpush1.bf16.msra.mxu0 0
        %978 = vmatprep.subr.bf16.mxu0 0
        %979 = vmatpush1.bf16.msra.mxu0 0
        %980 = vmatprep.subr.bf16.mxu0 0
        %981 = vmatpush1.bf16.msra.mxu0 0
        %982 = vmatprep.subr.bf16.mxu0 0
        %983 = vmatpush1.bf16.msra.mxu0 0
        %984 = vmatprep.subr.bf16.mxu0 0
        %985 = vmatpush1.bf16.msra.mxu0 0
        %986 = vmatprep.subr.bf16.mxu0 0
        %987 = vmatpush1.bf16.msra.mxu0 0
        %988 = vmatprep.mubr.bf16.mxu0 0
        %989 = vmatmul.mubr.bf16.gmra.mrb[0].mxu0 %v954
        %v990 = vpop.f32.mrb[0].mxu0
        %v991 = vadd.f32 0.0, %v990
        %v992 = vpop.f32.mrb[0].mxu0
        %v993 = vpop.f32.mrb[0].mxu0
        %v994 = vadd.f32 0.0, %v993
        %v995 = vpop.f32.mrb[0].mxu0
        %996 = vdwg.mxu0
        %s997 = scalar_lea.vmem %s8, 5
        %v998 = vld [vmem:[%s997] sm:$0x1]
        %v1000 = vlaneseq
        %v1001 = vshrl.u32 %v1000, 7
        %v1002 = vsub.s32 0, %v1001
        %v1003 = vrot.slane %v998, %v1002
        %v1005 = vadd.f32 %v991, %v1003
        %v1006 = vadd.f32 %v994, %v1003
        %v1007 = vmax.f32 %v1005, 0.0
        %v1008 = vmax.f32 %v1006, 0.0
        %v1009 = vpack.c.bf16 %v1008, %v1007
        %s1010 = scalar_lea.vmem [#allocation10], 320
        %v1011 = vld [vmem:[%s1010] sm:$0xf]
        %v1012 = vld [vmem:[%s1010 + $0x4] sm:$0xf]
        %v1013 = vld [vmem:[%s1010 + $0x8] sm:$0xf]
        %v1014 = vld [vmem:[%s1010 + $0xc] sm:$0xf]
        %v1015 = vld [vmem:[%s1010 + $0x10] sm:$0xf]
        %v1016 = vld [vmem:[%s1010 + $0x14] sm:$0xf]
        %v1017 = vld [vmem:[%s1010 + $0x18] sm:$0xf]
        %v1018 = vld [vmem:[%s1010 + $0x1c] sm:$0xf]
        %v1019 = vld [vmem:[%s1010 + $0x20] sm:$0xf]
        %v1020 = vld [vmem:[%s1010 + $0x24] sm:$0xf]
        %v1021 = vld [vmem:[%s1010 + $0x28] sm:$0xf]
        %v1022 = vld [vmem:[%s1010 + $0x2c] sm:$0xf]
        %v1023 = vld [vmem:[%s1010 + $0x30] sm:$0xf]
        %v1024 = vld [vmem:[%s1010 + $0x34] sm:$0xf]
        %v1025 = vld [vmem:[%s1010 + $0x38] sm:$0xf]
        %v1026 = vld [vmem:[%s1010 + $0x3c] sm:$0xf]
        %s1027 = scalar_lea.vmem %s8, 6
        %v1028 = vld [vmem:[%s1027] sm:$0x1]
        %v1030 = vlaneseq
        %v1031 = vshrl.u32 %v1030, 7
        %v1032 = vsub.s32 0, %v1031
        %v1033 = vrot.slane %v1028, %v1032
        %v1051 = vunpack.c.l.b16 %v1011
        %v1052 = vunpack.c.l.b16 %v1012
        %v1053 = vunpack.c.l.b16 %v1013
        %v1054 = vunpack.c.l.b16 %v1014
        %v1055 = vunpack.c.l.b16 %v1015
        %v1056 = vunpack.c.l.b16 %v1016
        %v1057 = vunpack.c.l.b16 %v1017
        %v1058 = vunpack.c.l.b16 %v1018
        %v1059 = vunpack.c.l.b16 %v1019
        %v1060 = vunpack.c.l.b16 %v1020
        %v1061 = vunpack.c.l.b16 %v1021
        %v1062 = vunpack.c.l.b16 %v1022
        %v1063 = vunpack.c.l.b16 %v1023
        %v1064 = vunpack.c.l.b16 %v1024
        %v1065 = vunpack.c.l.b16 %v1025
        %v1066 = vunpack.c.l.b16 %v1026
        %v1067 = vpack.c.b16 %v1052, %v1051
        %v1068 = vpack.c.b16 %v1054, %v1053
        %v1069 = vpack.c.b16 %v1056, %v1055
        %v1070 = vpack.c.b16 %v1058, %v1057
        %v1071 = vpack.c.b16 %v1060, %v1059
        %v1072 = vpack.c.b16 %v1062, %v1061
        %v1073 = vpack.c.b16 %v1064, %v1063
        %v1074 = vpack.c.b16 %v1066, %v1065
        %1083 = vmatprep.subr.bf16.mxu0 0
        %1084 = vmatpush1.bf16.msra.mxu0 %v1067
        %1085 = vmatprep.subr.bf16.mxu0 0
        %1086 = vmatpush1.bf16.msra.mxu0 %v1068
        %1087 = vmatprep.subr.bf16.mxu0 0
        %1088 = vmatpush1.bf16.msra.mxu0 %v1069
        %1089 = vmatprep.subr.bf16.mxu0 0
        %1090 = vmatpush1.bf16.msra.mxu0 %v1070
        %1091 = vmatprep.subr.bf16.mxu0 0
        %1092 = vmatpush1.bf16.msra.mxu0 %v1071
        %1093 = vmatprep.subr.bf16.mxu0 0
        %1094 = vmatpush1.bf16.msra.mxu0 %v1072
        %1095 = vmatprep.subr.bf16.mxu0 0
        %1096 = vmatpush1.bf16.msra.mxu0 %v1073
        %1097 = vmatprep.subr.bf16.mxu0 0
        %1098 = vmatpush1.bf16.msra.mxu0 %v1074
        %1099 = vmatprep.subr.bf16.mxu0 0
        %1100 = vmatpush1.bf16.msra.mxu0 0
        %1101 = vmatprep.subr.bf16.mxu0 0
        %1102 = vmatpush1.bf16.msra.mxu0 0
        %1103 = vmatprep.subr.bf16.mxu0 0
        %1104 = vmatpush1.bf16.msra.mxu0 0
        %1105 = vmatprep.subr.bf16.mxu0 0
        %1106 = vmatpush1.bf16.msra.mxu0 0
        %1107 = vmatprep.subr.bf16.mxu0 0
        %1108 = vmatpush1.bf16.msra.mxu0 0
        %1109 = vmatprep.subr.bf16.mxu0 0
        %1110 = vmatpush1.bf16.msra.mxu0 0
        %1111 = vmatprep.subr.bf16.mxu0 0
        %1112 = vmatpush1.bf16.msra.mxu0 0
        %1113 = vmatprep.subr.bf16.mxu0 0
        %1114 = vmatpush1.bf16.msra.mxu0 0
        %1115 = vmatprep.mubr.bf16.mxu0 0
        %1116 = vmatmul.mubr.bf16.gmra.mrb[0].mxu0 %v1009
        %v1117 = vpop.f32.mrb[0].mxu0
        %v1118 = vadd.f32 %v1033, %v1117
        %v1119 = vpop.f32.mrb[0].mxu0
        %v1120 = vpop.f32.mrb[0].mxu0
        %v1121 = vadd.f32 %v1033, %v1120
        %v1122 = vpop.f32.mrb[0].mxu0
        %1123 = vdwg.mxu0
        %1124 = vst [vmem:[%s486] sm:$0xff] %v1118
        %1125 = vst [vmem:[%s486 + $0x8] sm:$0xff] %v1121
        %s1126 = sand.u32 %s252, 1
        %s1127 = scalar_lea.sflag [#allocation4], %s1126
        %s1128 = sand.u32 %s252, 1
        %s1129 = smul.addr %s1128, 16
        %s1130 = scalar_lea.vmem [#allocation11], %s1129
        // Predicated region
        $region84: #{tpu_custom_call.1} parent=55 // pred_check
          %p1131 = pneg %p262
        $region85: #{tpu_custom_call.1} parent=55 // pred_check_branch
          %1133 = sbr.rel (%p1131) target = $region87
        $region86: #{tpu_custom_call.1} parent=55 // pred_region
          %s1135 = ssub.s32 256, 256
          %1136 = vsyncadd %s1127, %s1135
          %s1137 = smul.addr %s30, 2
          %s1138 = smul.addr %s1137, 128
          %s1139 = scalar_lea.hbm %s9, %s1138
          %s1140 = sshll.u32 %s1130, 4
          %s1141 = int_to_ptr.vmem [resolvable:$true] %s1140
          %1146 = dma.vmem_to_hbm [thread:$0]  %s1141, 256, %s1139, %s1127, 128, 128, 8
        $region87: #{tpu_custom_call.1} parent=55 // pred_fallthru
          _
      $region56: #{tpu_custom_call.1} parent=5 // pred_fallthru
        _
      %p1147 = scmp.le.s32.totalorder 2, %s25
      // Predicated region
      $region88: #{tpu_custom_call.1} parent=5 // pred_check
        %p1148 = pneg %p1147
      $region89: #{tpu_custom_call.1} parent=5 // pred_check_branch
        %1150 = sbr.rel (%p1148) target = $region91
      $region90: #{tpu_custom_call.1} parent=5 // pred_region
        %s1151 = ssub.s32 %s25, 2
        // Predicated region
        $region92: #{tpu_custom_call.1} parent=90 // pred_check
          %p1152 = pneg %p268
        $region93: #{tpu_custom_call.1} parent=90 // pred_check_branch
          %1154 = sbr.rel (%p1152) target = $region95
        $region94: #{tpu_custom_call.1} parent=90 // pred_region
          %s1155 = sand.u32 %s253, 1
          %s1156 = scalar_lea.sflag [#allocation4], %s1155
          %s1157 = sand.u32 %s253, 1
          %s1158 = smul.addr %s1157, 16
          %s1159 = scalar_lea.vmem [#allocation11], %s1158
          %1160 = dma.done %s1156, 256
        $region95: #{tpu_custom_call.1} parent=90 // pred_fallthru
          _
      $region91: #{tpu_custom_call.1} parent=5 // pred_fallthru
        _
    $region6: #{tpu_custom_call.1} parent=1 // loop_footer
      %s29 = sadd.s32 1, %s25
    $region7: #{tpu_custom_call.1} parent=1 // loop_footer_branch
      %24 = sbr.rel target = $region3
    $region8: #{tpu_custom_call.1} parent=1 // loop_exit
      _
    %1161 = vsyncpa [#allocation3], 1
    %s1162 = scalar_lea.sflag [#allocation3], 1
    %1163 = vsyncpa %s1162, 1
    %1164 = vsyncpa [#allocation6], 1
    %s1165 = scalar_lea.sflag [#allocation6], 1
    %1166 = vsyncpa %s1165, 1
    %1167 = vsyncpa [#allocation9], 1
    %1168 = vsyncpa [#allocation4], 1
    %s1169 = scalar_lea.sflag [#allocation4], 1
    %1170 = vsyncpa %s1169, 1

</llo_original>
